<compile_context>
chip_gen: v5e
topology: v5e:2x2
jax: 0.10.0
libtpu: 0.0.40
codegen_flags: <defaults>
</compile_context>

<pallas_src>
import functools

import jax
import jax.numpy as jnp
from jax import lax
from jax.experimental import pallas as pl
from jax.experimental.pallas import tpu as pltpu


def _round_up(a, b):
    return (a + b - 1) // b * b


def _hint(v, m):
    """pl.multiple_of for traced values, passthrough for static Python ints."""
    return v if isinstance(v, int) else pl.multiple_of(v, m)


def _product_kernel(x_ref, w_ref, o_ref, acc_ref, *, w_resident: bool,
                    single_step: bool):
    """One (TN, TP) tile of the masked running product.

    x_ref  : (TN, TP) f32      batch rows on sublanes, features on lanes
    w_ref  : (1, P_grid) f32   (resident)  or  (1, TP) f32 (tiled along k)
    o_ref  : (TN, 1) f32       per-row product (written on the last k step)
    acc_ref: (TN, 128) f32     per-lane partial products, resident across k
    """
    k = pl.program_id(1)
    tn, tp = x_ref.shape
    num_b = tn // 8            # 8-row sublane groups (one vreg of batch rows)
    num_c = tp // 128          # 128-lane feature slices (one vreg width)
    nc2 = num_c // 2

    ones8 = jnp.ones((8, 128), jnp.float32)   # hoisted; reused in all loops

    # Offset of this tile's features inside the weight block.
    w_base = (k * tp) if w_resident else 0

    def masked_term(row, lane):
        # Exact column-drop semantics: zero-weight (and padded / ragged-edge)
        # columns contribute exactly 1 even when x holds NaN/Inf there.
        xs = x_ref[pl.ds(row, 8), pl.ds(lane, 128)]          # (8, 128)
        widx = _hint(w_base + lane, 128)
        ws = w_ref[:, pl.ds(widx, 128)]                      # (1, 128) bcast
        return jnp.where(ws != 0.0, xs * ws, ones8)

    def tile_product(row, init):
        """init * prod over this tile's feature lanes, as (8, 128) partials."""
        def c_body(c2, accs):
            a0, a1 = accs
            lane0 = _hint(c2 * 256, 128)
            lane1 = _hint(c2 * 256 + 128, 128)
            return a0 * masked_term(row, lane0), a1 * masked_term(row, lane1)

        a0, a1 = lax.fori_loop(0, nc2, c_body, (init, ones8),
                               unroll=min(max(nc2, 1), 4))
        if num_c % 2:                                        # static tail
            a0 = a0 * masked_term(row, (num_c - 1) * 128)
        return a0 * a1

    def lane_reduce(a):
        # 7-step lane butterfly: every lane ends up holding the full product.
        for s in (64, 32, 16, 8, 4, 2, 1):
            a = a * pltpu.roll(a, shift=s, axis=1)
        return a[:, 0:1]                                     # (8, 1)

    if single_step:
        # Whole feature range in one grid step: skip the scratch round trips.
        def b_body(b, carry):
            row = _hint(b * 8, 8)
            a = tile_product(row, ones8)
            o_ref[pl.ds(row, 8), :] = lane_reduce(a)
            return carry

        lax.fori_loop(0, num_b, b_body, 0)
    else:
        @pl.when(k == 0)
        def _init():
            acc_ref[...] = jnp.ones_like(acc_ref)

        def b_body(b, carry):
            row = _hint(b * 8, 8)
            acc_ref[pl.ds(row, 8), :] = tile_product(
                row, acc_ref[pl.ds(row, 8), :])
            return carry

        lax.fori_loop(0, num_b, b_body, 0)

        @pl.when(k == pl.num_programs(1) - 1)
        def _finalize():
            def fin_body(b, carry):
                row = _hint(b * 8, 8)
                o_ref[pl.ds(row, 8), :] = lane_reduce(acc_ref[pl.ds(row, 8), :])
                return carry

            lax.fori_loop(0, num_b, fin_body, 0)


def product_model_forward(x, weights, *, tn=None, tp=None,
                          max_resident_features=16384):
    """x: [N, P], weights broadcastable to [1, P] -> [N] float32."""
    x = jnp.asarray(x, jnp.float32)
    n, p = x.shape
    w = jnp.asarray(weights, jnp.float32).reshape(-1)
    assert w.shape[0] == p

    n8 = _round_up(max(n, 1), 8)
    p_lane = _round_up(max(p, 1), 128)

    # Batch tile: multiple of 8 sublanes; ragged last tile handled by the grid
    # (no wrapper-side padding of x at all).
    if tn is None:
        tn = min(n8, 512)
    tn = max(8, min(_round_up(tn, 8), n8))

    # Feature tile: multiple of 128 lanes; target ~4 MiB per x tile
    # (~8 MiB double-buffered -> fits v5e/v6e/v7x default scoped VMEM).
    if tp is None:
        tp = min(max(128, (4 * 1024 * 1024) // (4 * tn)), 8192)
    tp = max(128, min(_round_up(tp, 128), p_lane))

    p_grid = _round_up(p, tp)
    num_k = p_grid // tp
    grid = (pl.cdiv(n, tn), num_k)

    # Zero-pad the (tiny) weights to the feature grid; padded columns act as
    # dropped columns so ragged / unspecified x lanes contribute exactly 1.
    w_pad = jnp.zeros((1, p_grid), jnp.float32).at[0, :p].set(w)

    w_resident = p_grid <= max_resident_features
    if w_resident:
        # Single DMA; stays VMEM-resident across the whole grid.
        w_spec = pl.BlockSpec((1, p_grid), lambda i, k: (0, 0))
    else:
        w_spec = pl.BlockSpec((1, tp), lambda i, k: (0, k))

    kernel = functools.partial(_product_kernel, w_resident=w_resident,
                               single_step=(num_k == 1))

    out = pl.pallas_call(
        kernel,
        out_shape=jax.ShapeDtypeStruct((n, 1), jnp.float32),
        grid=grid,
        in_specs=[
            pl.BlockSpec((tn, tp), lambda i, k: (i, k)),   # x, native layout
            w_spec,
        ],
        # Output block index is constant along k -> VMEM-resident across the
        # feature sweep; only written on the last feature step.
        out_specs=pl.BlockSpec((tn, 1), lambda i, k: (i, 0)),
        scratch_shapes=[pltpu.VMEM((tn, 128), jnp.float32)],
        compiler_params=pltpu.CompilerParams(
            dimension_semantics=("parallel", "arbitrary"),
            vmem_limit_bytes=32 * 1024 * 1024),
    )(x, w_pad)

    return out[:, 0]


def _reference(x, w):
    w = jnp.asarray(w, jnp.float32).reshape(1, -1)
    return jnp.prod(jnp.where(w != 0.0, jnp.asarray(x, jnp.float32) * w, 1.0),
                    axis=1)


if __name__ == "__main__":
    key = jax.random.PRNGKey(0)
    k1, k2 = jax.random.split(key)

    # --- Test 1: small shapes, zero weights, NaN inside a dropped column ----
    N, P = 8, 32
    x = 0.8 + 0.4 * jax.random.uniform(k1, (N, P), dtype=jnp.float32)
    j = jnp.arange(P, dtype=jnp.float32)
    weights = jnp.where(jnp.arange(P) % 4 == 3, 0.0, 0.9 + 0.01 * j)
    weights = weights.astype(jnp.float32).reshape(1, P)
    # Column 3 has weight 0 -> PyTorch drops it; NaN there must be ignored.
    x = x.at[:, 3].set(jnp.nan)

    out = jax.block_until_ready(product_model_forward(x, weights))
    ref = _reference(x, weights)
    assert out.shape == (N,)
    assert bool(jnp.all(jnp.isfinite(out)))
    assert jnp.allclose(out, ref, rtol=1e-5, atol=1e-5), (out, ref)

    # --- Test 2: ragged batch (N % 8 != 0), ragged features (P % 128 != 0),
    #             multi-step feature axis and non-resident (tiled) weights ---
    N2, P2 = 20, 300
    x2 = 0.9 + 0.2 * jax.random.uniform(k2, (N2, P2), dtype=jnp.float32)
    idx = jnp.arange(P2)
    w2 = jnp.where(idx % 7 == 0, 0.0,
                   jnp.where(idx % 2 == 0, 1.02, 0.98)).astype(jnp.float32)

    out2 = jax.block_until_ready(
        product_model_forward(x2, w2, tp=128, max_resident_features=0))
    ref2 = _reference(x2, w2)
    assert out2.shape == (N2,)
    assert jnp.allclose(out2, ref2, rtol=1e-3, atol=1e-3), (out2, ref2)

    print("KERNEL_OK")
</pallas_src>

<mosaic_0001>
module attributes {stable_mosaic.version = 11 : i64} {
  func.func @_product_kernel(%arg0: i32, %arg1: i32, %arg2: memref<8x128xf32, #tpu.memory_space<vmem>>, %arg3: memref<1x128xf32, #tpu.memory_space<vmem>>, %arg4: memref<8x1xf32, #tpu.memory_space<vmem>>, %arg5: memref<8x128xf32, #tpu.memory_space<vmem>>) attributes {dimension_semantics = [#tpu.dimension_semantics<parallel>, #tpu.dimension_semantics<arbitrary>], iteration_bounds = array<i64: 1, 1>, scalar_prefetch = 0 : i64, scratch_operands = 1 : i64, tpu.core_type = #tpu.core_type<tc>, window_params = [{transform_indices = @transform_0, window_bounds = array<i64: 8, 128>}, {pipeline_mode = #tpu.pipeline_mode<synchronous>, transform_indices = @transform_1, window_bounds = array<i64: 1, 128>}, {transform_indices = @transform_2, window_bounds = array<i64: 8, 1>}]} {
    %cst = arith.constant 1.000000e+00 : f32
    %0 = vector.broadcast %cst : f32 to vector<8x128xf32>
    %c128_i32 = arith.constant 128 : i32
    %1 = arith.muli %arg1, %c128_i32 : i32
    %c0_i32 = arith.constant 0 : i32
    %c8_i32 = arith.constant 8 : i32
    %2 = arith.muli %c0_i32, %c8_i32 : i32
    %3 = tpu.assume_multiple %2, 8 : i32
    %c0_i32_0 = arith.constant 0 : i32
    %c0_i32_1 = arith.constant 0 : i32
    %4 = arith.addi %c0_i32_0, %c0_i32_1 : i32
    %c1_i32 = arith.constant 1 : i32
    %5:2 = scf.for %arg6 = %c0_i32_0 to %4 step %c1_i32 iter_args(%arg7 = %0, %arg8 = %0) -> (vector<8x128xf32>, vector<8x128xf32>)  : i32 {
      %c256_i32 = arith.constant 256 : i32
      %38 = arith.muli %arg6, %c256_i32 : i32
      %39 = tpu.assume_multiple %38, 128 : i32
      %c256_i32_10 = arith.constant 256 : i32
      %40 = arith.muli %arg6, %c256_i32_10 : i32
      %c128_i32_11 = arith.constant 128 : i32
      %41 = arith.addi %40, %c128_i32_11 : i32
      %42 = tpu.assume_multiple %41, 128 : i32
      %43 = arith.index_cast %3 : i32 to index
      %44 = arith.index_cast %39 : i32 to index
      %45 = vector.load %arg2[%43, %44] : memref<8x128xf32, #tpu.memory_space<vmem>>, vector<8x128xf32>
      %46 = arith.addi %1, %39 : i32
      %47 = tpu.assume_multiple %46, 128 : i32
      %c0_12 = arith.constant 0 : index
      %48 = arith.index_cast %47 : i32 to index
      %49 = vector.load %arg3[%c0_12, %48] : memref<1x128xf32, #tpu.memory_space<vmem>>, vector<1x128xf32>
      %cst_13 = arith.constant 0.000000e+00 : f32
      %50 = vector.broadcast %cst_13 : f32 to vector<1x128xf32>
      %51 = arith.cmpf one, %49, %50 : vector<1x128xf32>
      %52 = vector.broadcast %49 : vector<1x128xf32> to vector<8x128xf32>
      %53 = arith.mulf %45, %52 : vector<8x128xf32>
      %54 = vector.shape_cast %51 : vector<1x128xi1> to vector<1x128xi1>
      %55 = vector.broadcast %54 : vector<1x128xi1> to vector<8x128xi1>
      %56 = arith.select %55, %53, %0 : vector<8x128xi1>, vector<8x128xf32>
      %57 = arith.mulf %arg7, %56 : vector<8x128xf32>
      %58 = arith.index_cast %3 : i32 to index
      %59 = arith.index_cast %42 : i32 to index
      %60 = vector.load %arg2[%58, %59] : memref<8x128xf32, #tpu.memory_space<vmem>>, vector<8x128xf32>
      %61 = arith.addi %1, %42 : i32
      %62 = tpu.assume_multiple %61, 128 : i32
      %c0_14 = arith.constant 0 : index
      %63 = arith.index_cast %62 : i32 to index
      %64 = vector.load %arg3[%c0_14, %63] : memref<1x128xf32, #tpu.memory_space<vmem>>, vector<1x128xf32>
      %cst_15 = arith.constant 0.000000e+00 : f32
      %65 = vector.broadcast %cst_15 : f32 to vector<1x128xf32>
      %66 = arith.cmpf one, %64, %65 : vector<1x128xf32>
      %67 = vector.broadcast %64 : vector<1x128xf32> to vector<8x128xf32>
      %68 = arith.mulf %60, %67 : vector<8x128xf32>
      %69 = vector.shape_cast %66 : vector<1x128xi1> to vector<1x128xi1>
      %70 = vector.broadcast %69 : vector<1x128xi1> to vector<8x128xi1>
      %71 = arith.select %70, %68, %0 : vector<8x128xi1>, vector<8x128xf32>
      %72 = arith.mulf %arg8, %71 : vector<8x128xf32>
      scf.yield %57, %72 : vector<8x128xf32>, vector<8x128xf32>
    }
    %c0_i32_2 = arith.constant 0 : i32
    %6 = arith.index_cast %3 : i32 to index
    %c0 = arith.constant 0 : index
    %7 = vector.load %arg2[%6, %c0] : memref<8x128xf32, #tpu.memory_space<vmem>>, vector<8x128xf32>
    %c0_i32_3 = arith.constant 0 : i32
    %8 = arith.addi %1, %c0_i32_3 : i32
    %9 = tpu.assume_multiple %8, 128 : i32
    %c0_4 = arith.constant 0 : index
    %10 = arith.index_cast %9 : i32 to index
    %11 = vector.load %arg3[%c0_4, %10] : memref<1x128xf32, #tpu.memory_space<vmem>>, vector<1x128xf32>
    %cst_5 = arith.constant 0.000000e+00 : f32
    %12 = vector.broadcast %cst_5 : f32 to vector<1x128xf32>
    %13 = arith.cmpf one, %11, %12 : vector<1x128xf32>
    %14 = vector.broadcast %11 : vector<1x128xf32> to vector<8x128xf32>
    %15 = arith.mulf %7, %14 : vector<8x128xf32>
    %16 = vector.shape_cast %13 : vector<1x128xi1> to vector<1x128xi1>
    %17 = vector.broadcast %16 : vector<1x128xi1> to vector<8x128xi1>
    %18 = arith.select %17, %15, %0 : vector<8x128xi1>, vector<8x128xf32>
    %19 = arith.mulf %5#0, %18 : vector<8x128xf32>
    %20 = arith.mulf %19, %5#1 : vector<8x128xf32>
    %c64_i32 = arith.constant 64 : i32
    %21 = tpu.dynamic_rotate %20 by %c64_i32 dim 1 : vector<8x128xf32>, i32 -> vector<8x128xf32>
    %22 = arith.mulf %20, %21 : vector<8x128xf32>
    %c32_i32 = arith.constant 32 : i32
    %23 = tpu.dynamic_rotate %22 by %c32_i32 dim 1 : vector<8x128xf32>, i32 -> vector<8x128xf32>
    %24 = arith.mulf %22, %23 : vector<8x128xf32>
    %c16_i32 = arith.constant 16 : i32
    %25 = tpu.dynamic_rotate %24 by %c16_i32 dim 1 : vector<8x128xf32>, i32 -> vector<8x128xf32>
    %26 = arith.mulf %24, %25 : vector<8x128xf32>
    %c8_i32_6 = arith.constant 8 : i32
    %27 = tpu.dynamic_rotate %26 by %c8_i32_6 dim 1 : vector<8x128xf32>, i32 -> vector<8x128xf32>
    %28 = arith.mulf %26, %27 : vector<8x128xf32>
    %c4_i32 = arith.constant 4 : i32
    %29 = tpu.dynamic_rotate %28 by %c4_i32 dim 1 : vector<8x128xf32>, i32 -> vector<8x128xf32>
    %30 = arith.mulf %28, %29 : vector<8x128xf32>
    %c2_i32 = arith.constant 2 : i32
    %31 = tpu.dynamic_rotate %30 by %c2_i32 dim 1 : vector<8x128xf32>, i32 -> vector<8x128xf32>
    %32 = arith.mulf %30, %31 : vector<8x128xf32>
    %c1_i32_7 = arith.constant 1 : i32
    %33 = tpu.dynamic_rotate %32 by %c1_i32_7 dim 1 : vector<8x128xf32>, i32 -> vector<8x128xf32>
    %34 = arith.mulf %32, %33 : vector<8x128xf32>
    %35 = vector.extract_strided_slice %34 {offsets = [0, 0], sizes = [8, 1], strides = [1, 1]} : vector<8x128xf32> to vector<8x1xf32>
    %36 = arith.index_cast %3 : i32 to index
    %c0_8 = arith.constant 0 : index
    %37 = vector.load %arg4[%36, %c0_8] : memref<8x1xf32, #tpu.memory_space<vmem>>, vector<8x1xf32>
    tpu.vector_store %arg4[%36, %c0_8], %35 {strides = array<i32>} : memref<8x1xf32, #tpu.memory_space<vmem>>, vector<8x1xf32>,
    %c1_i32_9 = arith.constant 1 : i32
    return
  }
  func.func @transform_0(%arg0: i32, %arg1: i32) -> (i32, i32) {
    %c0_i32 = arith.constant 0 : i32
    return %arg0, %arg1 : i32, i32
  }
  func.func @transform_1(%arg0: i32, %arg1: i32) -> (i32, i32) {
    %c0_i32 = arith.constant 0 : i32
    %c0_i32_0 = arith.constant 0 : i32
    %c0_i32_1 = arith.constant 0 : i32
    return %c0_i32, %c0_i32_0 : i32, i32
  }
  func.func @transform_2(%arg0: i32, %arg1: i32) -> (i32, i32) {
    %c0_i32 = arith.constant 0 : i32
    %c0_i32_0 = arith.constant 0 : i32
    return %arg0, %c0_i32 : i32, i32
  }
}

</mosaic_0001>

<llo_original>
// kernel: tpu_custom_call.1
$region0: #{tpu_custom_call.1}
  #allocation0 [shape = 'u32[]', space=smem, size = 0x4, offset = 0x4, fixed_abs, tag = 'smem constant byte address 0x4 - core index']
  #allocation1 [shape = 'u32[72,128]{1,0:T(1,128)}', space=vmem, size = 0x9000, scoped, tag = 'internal scratch']
  #allocation2 [shape = 'f32[8,128]{1,0:T(8,128)}', space=vmem, size = 0x1000, scoped, tag = 'scratch operand']
  %s0 = inlined_call_operand.hbm [shape: f32[8,32], index: 0, kind: input, shape index: {}]
  %s1 = inlined_call_operand.hbm [shape: f32[1,128], index: 1, kind: input, shape index: {}]
  %s2 = inlined_call_operand.vmem [shape: f32[8,1], index: 2, kind: output, shape index: {}]
  %s3 = sld [smem:[#allocation0]]
  $region26: #{tpu_custom_call.1} parent=0
    _
  %s5 = ssub.s32 1, %s3
  %s6 = scalar_select 0, %s5, %s3
  $region1: #{tpu_custom_call.1} parent=0
    #allocation3 [shape = 'u8[4096]{0}', space=vmem, size = 0x1000, scoped, tag = 'input window, operand 0, single buffered']
    #allocation4 [shape = 's32[1]{0}', space=sflag, size = 0x4, scoped, tag = 'scoped memory for tpu_custom_call.1']
    #allocation5 [shape = 'u8[512]{0}', space=vmem, size = 0x400, scoped, tag = 'input window, operand 1, single buffered']
    #allocation6 [shape = 's32[1]{0}', space=sflag, size = 0x4, scoped, tag = 'scoped memory for tpu_custom_call.1']
    %7 = vsyncpa [#allocation4], 0
    %8 = vsyncpa [#allocation6], 0
    // Predicated region
    $region2: #{tpu_custom_call.1} parent=1 // pred_check
      _
    $region3: #{tpu_custom_call.1} parent=1 // pred_check_branch
      %10 = sbr.rel (0) target = $region5
    $region4: #{tpu_custom_call.1} parent=1 // pred_region
      %12 = vsyncadd [#allocation4], 0
      %s14 = sshll.u32 %s0, 4
      %s15 = int_to_ptr.hbm [resolvable:$true] %s14
      %s16 = sshll.u32 [#allocation3], 4
      %s17 = int_to_ptr.vmem [resolvable:$true] %s16
      %19 = dma.hbm_to_vmem [thread:$0]  %s15, 128, %s17, [#allocation4]
    $region5: #{tpu_custom_call.1} parent=1 // pred_fallthru
      _
    // Predicated region
    $region6: #{tpu_custom_call.1} parent=1 // pred_check
      _
    $region7: #{tpu_custom_call.1} parent=1 // pred_check_branch
      %21 = sbr.rel (0) target = $region9
    $region8: #{tpu_custom_call.1} parent=1 // pred_region
      %23 = vsyncadd [#allocation6], 0
      %s25 = sshll.u32 %s1, 4
      %s26 = int_to_ptr.hbm [resolvable:$true] %s25
      %s27 = sshll.u32 [#allocation5], 4
      %s28 = int_to_ptr.vmem [resolvable:$true] %s27
      %30 = dma.hbm_to_vmem [thread:$0]  %s26, 16, %s28, [#allocation6]
    $region9: #{tpu_custom_call.1} parent=1 // pred_fallthru
      _
    // Predicated region
    $region10: #{tpu_custom_call.1} parent=1 // pred_check
      _
    $region11: #{tpu_custom_call.1} parent=1 // pred_check_branch
      %32 = sbr.rel (0) target = $region13
    $region12: #{tpu_custom_call.1} parent=1 // pred_region
      %34 = dma.done [#allocation4], 128
    $region13: #{tpu_custom_call.1} parent=1 // pred_fallthru
      _
    // Predicated region
    $region14: #{tpu_custom_call.1} parent=1 // pred_check
      _
    $region15: #{tpu_custom_call.1} parent=1 // pred_check_branch
      %36 = sbr.rel (0) target = $region17
    $region16: #{tpu_custom_call.1} parent=1 // pred_region
      %38 = dma.done [#allocation6], 16
    $region17: #{tpu_custom_call.1} parent=1 // pred_fallthru
      _
    %s39 = smul.u32 0, 128
    %v40 = vld [vmem:[#allocation3] sm:$0xff]
    %s41 = sshra.s32 %s39, 7
    %s42 = sand.u32 %s39, 127
    %s43 = scalar_lea.vmem [#allocation5], %s41
    %v44 = vld [vmem:[%s43] sm:$0x1]
    %vm45 = vcmp.ne.f32.partialorder %v44, 0.0
    %v47 = vperm.slane %v44, 0
    %v49 = vmul.f32 %v40, %v47
    %v50 = vsel %vm45, 1, 0
    %v51 = vperm.slane %v50, 0
    %vm52 = vcmp.eq.s32.totalorder %v51, 1
    %v53 = vsel %vm52, %v49, 1.0
    %54 = vrot.lane.b32.xlu0 %v53, 64
    %v55 = vpop.permute.xlu0 %54
    %v56 = vmul.f32 %v53, %v55
    %57 = vrot.lane.b32.xlu0 %v56, 32
    %v58 = vpop.permute.xlu0 %57
    %v59 = vmul.f32 %v56, %v58
    %60 = vrot.lane.b32.xlu0 %v59, 16
    %v61 = vpop.permute.xlu0 %60
    %v62 = vmul.f32 %v59, %v61
    %63 = vrot.lane.b32.xlu0 %v62, 8
    %v64 = vpop.permute.xlu0 %63
    %v65 = vmul.f32 %v62, %v64
    %66 = vrot.lane.b32.xlu0 %v65, 4
    %v67 = vpop.permute.xlu0 %66
    %v68 = vmul.f32 %v65, %v67
    %69 = vrot.lane.b32.xlu0 %v68, 2
    %v70 = vpop.permute.xlu0 %69
    %v71 = vmul.f32 %v68, %v70
    %72 = vrot.lane.b32.xlu0 %v71, 1
    %v73 = vpop.permute.xlu0 %72
    %v74 = vmul.f32 %v71, %v73
    %vm75 = vcmask 7168
    %76 = vst.msk [vmem:[%s2] sm:$0xff] %vm75, %v74
    // Predicated region
    $region18: #{tpu_custom_call.1} parent=1 // pred_check
      _
    $region19: #{tpu_custom_call.1} parent=1 // pred_check_branch
      %78 = sbr.rel (0) target = $region21
    $region20: #{tpu_custom_call.1} parent=1 // pred_region
      _
    $region21: #{tpu_custom_call.1} parent=1 // pred_fallthru
      _
    // Predicated region
    $region22: #{tpu_custom_call.1} parent=1 // pred_check
      _
    $region23: #{tpu_custom_call.1} parent=1 // pred_check_branch
      %80 = sbr.rel (0) target = $region25
    $region24: #{tpu_custom_call.1} parent=1 // pred_region
      _
    $region25: #{tpu_custom_call.1} parent=1 // pred_fallthru
      _
    %81 = vsyncpa [#allocation4], 1
    %82 = vsyncpa [#allocation6], 1

</llo_original>
